<compile_context>
chip_gen: v7x
topology: tpu7x:2x2x1
jax: 0.10.0
libtpu: 0.0.40
codegen_flags: <defaults>
</compile_context>

<pallas_src>
from enum import Enum

import jax
import jax.numpy as jnp
import numpy as np
from jax.experimental import pallas as pl
from jax.experimental.pallas import tpu as pltpu


class ChangeState(Enum):
    NORMALIZE = 0
    DENORMALIZE = 1
    OFF = 2


_KITTI_MEAN = jnp.array(
    [93.70454143384742, 98.28243432206516, 94.84678088809876], dtype=jnp.float32
)
_KITTI_VAR = jnp.array(
    [5411.79935676, 5758.60456747, 5890.31451232], dtype=jnp.float32
)

_LANE = 128
_MAX_LANE_TILE = 32768   # lane-dense and still leaves many p-blocks for real shapes


# ---------------- hardware / tiling helpers ----------------

def _hw_budget():
    """(block_bytes, vmem_limit_bytes) tuned per TPU generation."""
    try:
        kind = jax.devices()[0].device_kind.lower()
    except Exception:  # pragma: no cover - conservative default
        kind = ""
    if "v7" in kind or "7x" in kind:
        # 3.2 TB/s HBM: 4 MiB blocks keep per-step overhead <~15% of transfer.
        return 4 << 20, 32 << 20
    if "v6" in kind:
        return 2 << 20, 32 << 20
    # v5e (0.8 TB/s) & unknown: 1 MiB blocks are already ~90% of roofline.
    return 1 << 20, 32 << 20


def _sublane_unit(dtype):
    # Native sublane packing: f32 -> 8, bf16 -> 16, int8/fp8 -> 32.
    return max(8, 32 // jnp.dtype(dtype).itemsize)


def _choose_tiles(num_rows, num_lanes, dtype, block_bytes):
    """Pick (row_tile, lane_tile) for a (num_rows, num_lanes) streaming sweep.

    Lane tile: multiple of 128 (unmasked stores except the single tail block),
    capped at _MAX_LANE_TILE; full extent if num_lanes < 128.
    Row tile: multiple of the dtype's sublane unit sized to the byte budget,
    or the full extent if it already fits.
    Used with a cdiv grid so no divisibility of the array shape is required.
    """
    elem = jnp.dtype(dtype).itemsize
    sub = _sublane_unit(dtype)
    if num_lanes <= _LANE:
        lane_tile = num_lanes                                  # full extent (legal)
    else:
        lane_tile = min(_MAX_LANE_TILE, (num_lanes // _LANE) * _LANE)
    max_rows = max(sub, block_bytes // (lane_tile * elem))
    if num_rows <= max_rows:
        row_tile = num_rows                                    # single row block
    else:
        row_tile = max(sub, (max_rows // sub) * sub)
    return row_tile, lane_tile


# ---------------- Pallas kernels ----------------

def _make_affine_kernel(row_tile, num_row_blocks):
    """y = x * scale + bias with per-row (= per folded (n, c)) coefficients.

    scale/bias arrive as one resident (R_pad, 1) VMEM block; slice the rows for
    the current r-block in-kernel (aligned: row_tile is a sublane multiple when
    there is more than one row block).
    """
    if num_row_blocks == 1:
        def kernel(scale_ref, bias_ref, x_ref, o_ref):
            o_ref[...] = (x_ref[...] * scale_ref[...] + bias_ref[...]).astype(o_ref.dtype)
        return kernel

    def kernel(scale_ref, bias_ref, x_ref, o_ref):
        start = pl.multiple_of(pl.program_id(0) * row_tile, row_tile)
        s = scale_ref[pl.ds(start, row_tile), :]
        b = bias_ref[pl.ds(start, row_tile), :]
        o_ref[...] = (x_ref[...] * s + b).astype(o_ref.dtype)
    return kernel


def _sigmoid_kernel(x_ref, o_ref):
    # EUP-friendly sigmoid: tanh lives in the EUP slot (idle in this kernel)
    # instead of a VALU Newton-Raphson divide.  sigmoid(x) = 0.5*tanh(x/2)+0.5.
    xv = x_ref[...].astype(jnp.float32)
    o_ref[...] = (0.5 * jnp.tanh(0.5 * xv) + 0.5).astype(o_ref.dtype)


# ---------------- wrappers ----------------

def _normalize_pallas(x, scale_c, bias_c):
    N, C, H, W = x.shape
    R, P = N * C, H * W
    x2 = x.reshape(R, P)                      # lane-dense 2D view (contiguous NCHW)

    block_bytes, vmem_limit = _hw_budget()
    Rb, Pb = _choose_tiles(R, P, x.dtype, block_bytes)
    n_r, n_p = pl.cdiv(R, Rb), pl.cdiv(P, Pb)
    R_pad = n_r * Rb

    # Per-row affine coefficients (row r -> channel r % C), padded so the
    # in-kernel row slice of the resident (R_pad, 1) block never goes OOB.
    scale_rows = jnp.tile(scale_c, N)
    bias_rows = jnp.tile(bias_c, N)
    if R_pad > R:
        scale_rows = jnp.pad(scale_rows, ((0, R_pad - R),))
        bias_rows = jnp.pad(bias_rows, ((0, R_pad - R),))
    scale_rows = scale_rows.reshape(R_pad, 1).astype(jnp.float32)
    bias_rows = bias_rows.reshape(R_pad, 1).astype(jnp.float32)

    itemsize = jnp.dtype(x.dtype).itemsize
    cost = pl.CostEstimate(
        flops=2 * R * P,
        transcendentals=0,
        bytes_accessed=2 * R * P * itemsize + 2 * R_pad * 4,
    )

    out2 = pl.pallas_call(
        _make_affine_kernel(Rb, n_r),
        out_shape=jax.ShapeDtypeStruct((R, P), x.dtype),
        grid_spec=pl.GridSpec(
            grid=(n_r, n_p),
            in_specs=[
                # scale / bias: constant block index -> fetched once, stays resident.
                pl.BlockSpec((R_pad, 1), lambda r, p: (0, 0)),
                pl.BlockSpec((R_pad, 1), lambda r, p: (0, 0)),
                pl.BlockSpec((Rb, Pb), lambda r, p: (r, p)),
            ],
            out_specs=pl.BlockSpec((Rb, Pb), lambda r, p: (r, p)),
        ),
        compiler_params=pltpu.CompilerParams(
            dimension_semantics=("parallel", "parallel"),
            vmem_limit_bytes=vmem_limit,
        ),
        cost_estimate=cost,
    )(scale_rows, bias_rows, x2)
    return out2.reshape(N, C, H, W)


def _denormalize_pallas(x):
    N, C, H, W = x.shape
    R, P = N * C, H * W
    x2 = x.reshape(R, P)

    block_bytes, vmem_limit = _hw_budget()
    Rb, Pb = _choose_tiles(R, P, x.dtype, block_bytes)
    n_r, n_p = pl.cdiv(R, Rb), pl.cdiv(P, Pb)

    itemsize = jnp.dtype(x.dtype).itemsize
    cost = pl.CostEstimate(
        flops=3 * R * P,
        transcendentals=R * P,
        bytes_accessed=2 * R * P * itemsize,
    )

    out2 = pl.pallas_call(
        _sigmoid_kernel,
        out_shape=jax.ShapeDtypeStruct((R, P), x.dtype),
        grid_spec=pl.GridSpec(
            grid=(n_r, n_p),
            in_specs=[pl.BlockSpec((Rb, Pb), lambda r, p: (r, p))],
            out_specs=pl.BlockSpec((Rb, Pb), lambda r, p: (r, p)),
        ),
        compiler_params=pltpu.CompilerParams(
            dimension_semantics=("parallel", "parallel"),
            vmem_limit_bytes=vmem_limit,
        ),
        cost_estimate=cost,
    )(x2)
    return out2.reshape(N, C, H, W)


class ChangeImageStatsToKitti:
    """JAX/Pallas port of the PyTorch module (forward pass only)."""

    SIGMA_MIN = 1e-05

    def __init__(self, direction: ChangeState, input_channels: int = 3):
        if input_channels % 3 != 0:
            raise ValueError(
                f"input_channels {input_channels}, should divide be 3 "
            )
        self.direction = direction
        self.channel_repeat_factor = input_channels // 3
        # Buffers equivalent to the registered (C,1,1) mean/var; kept as (C,).
        self.mean = jnp.tile(_KITTI_MEAN, self.channel_repeat_factor)
        self.var = jnp.tile(_KITTI_VAR, self.channel_repeat_factor)
        # Fold normalization into one affine: y = x * scale + bias
        #   == (x - mean) / sqrt(var + eps).
        self.scale = 1.0 / jnp.sqrt(self.var + self.SIGMA_MIN)
        self.bias = -self.mean * self.scale

    def __call__(self, x):
        if self.direction == ChangeState.NORMALIZE:
            return _normalize_pallas(x, self.scale, self.bias)
        elif self.direction == ChangeState.DENORMALIZE:
            return _denormalize_pallas(x)
        elif self.direction == ChangeState.OFF:
            return x
        raise ValueError(f"Invalid stats change direction {self.direction}")


if __name__ == "__main__":
    key = jax.random.PRNGKey(0)
    N, C, H, W = 2, 6, 16, 16   # C must be a multiple of 3 (channel repeat = 2)
    x = jax.random.uniform(key, (N, C, H, W), dtype=jnp.float32) * 255.0

    # --- NORMALIZE path ---
    norm_mod = ChangeImageStatsToKitti(ChangeState.NORMALIZE, input_channels=C)
    y_norm = jax.block_until_ready(norm_mod(x))
    mean_b = norm_mod.mean[None, :, None, None]
    var_b = norm_mod.var[None, :, None, None]
    ref_norm = (x - mean_b) / jnp.sqrt(var_b + ChangeImageStatsToKitti.SIGMA_MIN)
    np.testing.assert_allclose(np.asarray(y_norm), np.asarray(ref_norm),
                               rtol=1e-5, atol=1e-5)

    # --- DENORMALIZE path (sigmoid) ---
    denorm_mod = ChangeImageStatsToKitti(ChangeState.DENORMALIZE, input_channels=C)
    y_denorm = jax.block_until_ready(denorm_mod(y_norm))
    ref_denorm = jax.nn.sigmoid(y_norm)
    np.testing.assert_allclose(np.asarray(y_denorm), np.asarray(ref_denorm),
                               rtol=1e-5, atol=1e-6)

    # --- OFF path (identity) ---
    off_mod = ChangeImageStatsToKitti(ChangeState.OFF, input_channels=C)
    y_off = jax.block_until_ready(off_mod(x))
    np.testing.assert_allclose(np.asarray(y_off), np.asarray(x))

    # --- Non-128-divisible spatial size (exercises the masked-tail cdiv grid) ---
    x_odd = jax.random.uniform(jax.random.PRNGKey(1), (1, 3, 10, 20),
                               dtype=jnp.float32) * 255.0
    norm3 = ChangeImageStatsToKitti(ChangeState.NORMALIZE, input_channels=3)
    y_odd = jax.block_until_ready(norm3(x_odd))
    ref_odd = (x_odd - norm3.mean[None, :, None, None]) / jnp.sqrt(
        norm3.var[None, :, None, None] + ChangeImageStatsToKitti.SIGMA_MIN)
    np.testing.assert_allclose(np.asarray(y_odd), np.asarray(ref_odd),
                               rtol=1e-5, atol=1e-5)

    denorm3 = ChangeImageStatsToKitti(ChangeState.DENORMALIZE, input_channels=3)
    y_odd_s = jax.block_until_ready(denorm3(y_odd))
    np.testing.assert_allclose(np.asarray(y_odd_s), np.asarray(jax.nn.sigmoid(y_odd)),
                               rtol=1e-5, atol=1e-6)

    print("KERNEL_OK")
</pallas_src>

<mosaic_0001>
module attributes {stable_mosaic.version = 11 : i64} {
  func.func @kernel(%arg0: i32, %arg1: i32, %arg2: memref<12x1xf32, #tpu.memory_space<vmem>>, %arg3: memref<12x1xf32, #tpu.memory_space<vmem>>, %arg4: memref<12x256xf32, #tpu.memory_space<vmem>>, %arg5: memref<12x256xf32, #tpu.memory_space<vmem>>) attributes {dimension_semantics = [#tpu.dimension_semantics<parallel>, #tpu.dimension_semantics<parallel>], iteration_bounds = array<i64: 1, 1>, scalar_prefetch = 0 : i64, scratch_operands = 0 : i64, tpu.core_type = #tpu.core_type<tc>, window_params = [{pipeline_mode = #tpu.pipeline_mode<synchronous>, transform_indices = @transform_0, window_bounds = array<i64: 12, 1>}, {pipeline_mode = #tpu.pipeline_mode<synchronous>, transform_indices = @transform_1, window_bounds = array<i64: 12, 1>}, {transform_indices = @transform_2, window_bounds = array<i64: 12, 256>}, {transform_indices = @transform_3, window_bounds = array<i64: 12, 256>}]} {
    %c0 = arith.constant 0 : index
    %c0_0 = arith.constant 0 : index
    %0 = vector.load %arg4[%c0, %c0_0] : memref<12x256xf32, #tpu.memory_space<vmem>>, vector<12x256xf32>
    %c0_1 = arith.constant 0 : index
    %c0_2 = arith.constant 0 : index
    %1 = vector.load %arg2[%c0_1, %c0_2] : memref<12x1xf32, #tpu.memory_space<vmem>>, vector<12x1xf32>
    %2 = vector.broadcast %1 : vector<12x1xf32> to vector<12x256xf32>
    %3 = arith.mulf %0, %2 : vector<12x256xf32>
    %c0_3 = arith.constant 0 : index
    %c0_4 = arith.constant 0 : index
    %4 = vector.load %arg3[%c0_3, %c0_4] : memref<12x1xf32, #tpu.memory_space<vmem>>, vector<12x1xf32>
    %5 = vector.broadcast %4 : vector<12x1xf32> to vector<12x256xf32>
    %6 = arith.addf %3, %5 : vector<12x256xf32>
    %c0_5 = arith.constant 0 : index
    %c0_6 = arith.constant 0 : index
    %7 = vector.load %arg5[%c0_5, %c0_6] : memref<12x256xf32, #tpu.memory_space<vmem>>, vector<12x256xf32>
    tpu.vector_store %arg5[%c0_5, %c0_6], %6 {strides = array<i32>} : memref<12x256xf32, #tpu.memory_space<vmem>>, vector<12x256xf32>,
    return
  }
  func.func @transform_0(%arg0: i32, %arg1: i32) -> (i32, i32) {
    %c0_i32 = arith.constant 0 : i32
    %c0_i32_0 = arith.constant 0 : i32
    %c0_i32_1 = arith.constant 0 : i32
    return %c0_i32, %c0_i32_0 : i32, i32
  }
  func.func @transform_1(%arg0: i32, %arg1: i32) -> (i32, i32) {
    %c0_i32 = arith.constant 0 : i32
    %c0_i32_0 = arith.constant 0 : i32
    %c0_i32_1 = arith.constant 0 : i32
    return %c0_i32, %c0_i32_0 : i32, i32
  }
  func.func @transform_2(%arg0: i32, %arg1: i32) -> (i32, i32) {
    %c0_i32 = arith.constant 0 : i32
    return %arg0, %arg1 : i32, i32
  }
  func.func @transform_3(%arg0: i32, %arg1: i32) -> (i32, i32) {
    %c0_i32 = arith.constant 0 : i32
    return %arg0, %arg1 : i32, i32
  }
}

</mosaic_0001>

<llo_original>
// kernel: tpu_custom_call.1
$region0: #{tpu_custom_call.1}
  #allocation0 [shape = 'u32[]', space=smem, size = 0x4, offset = 0x4, fixed_abs, tag = 'smem constant byte address 0x4 - core index']
  #allocation1 [shape = 'u32[144,128]{1,0:T(1,128)}', space=vmem, size = 0x12000, scoped, tag = 'internal scratch']
  %s0 = inlined_call_operand.vmem [shape: f32[12,1], index: 0, kind: input, shape index: {}]
  %s1 = inlined_call_operand.vmem [shape: f32[12,1], index: 1, kind: input, shape index: {}]
  %s2 = inlined_call_operand.vmem [shape: f32[12,256], index: 2, kind: input, shape index: {}]
  %s3 = inlined_call_operand.hbm [shape: f32[12,256], index: 3, kind: output, shape index: {}]
  %s4 = sld [smem:[#allocation0]]
  $region22: #{tpu_custom_call.1} parent=0
    _
  %s6 = ssub.s32 1, %s4
  %s7 = scalar_select 0, %s6, %s4
  $region1: #{tpu_custom_call.1} parent=0
    #allocation2 [shape = 'u8[16384]{0}', space=vmem, size = 0x4000, scoped, tag = 'output window, operand 0, single buffered']
    #allocation3 [shape = 's32[1]{0}', space=sflag, size = 0x4, scoped, tag = 'scoped memory for tpu_custom_call.1']
    %8 = vsyncpa [#allocation3], 0
    // Predicated region
    $region2: #{tpu_custom_call.1} parent=1 // pred_check
      _
    $region3: #{tpu_custom_call.1} parent=1 // pred_check_branch
      %10 = sbr.rel (0) target = $region5
    $region4: #{tpu_custom_call.1} parent=1 // pred_region
      _
    $region5: #{tpu_custom_call.1} parent=1 // pred_fallthru
      _
    // Predicated region
    $region6: #{tpu_custom_call.1} parent=1 // pred_check
      _
    $region7: #{tpu_custom_call.1} parent=1 // pred_check_branch
      %12 = sbr.rel (0) target = $region9
    $region8: #{tpu_custom_call.1} parent=1 // pred_region
      _
    $region9: #{tpu_custom_call.1} parent=1 // pred_fallthru
      _
    // Predicated region
    $region10: #{tpu_custom_call.1} parent=1 // pred_check
      _
    $region11: #{tpu_custom_call.1} parent=1 // pred_check_branch
      %14 = sbr.rel (0) target = $region13
    $region12: #{tpu_custom_call.1} parent=1 // pred_region
      _
    $region13: #{tpu_custom_call.1} parent=1 // pred_fallthru
      _
    %v15 = vld [vmem:[%s2] sm:$0xff]
    %v16 = vld [vmem:[%s2 + $0x8] sm:$0xff]
    %v17 = vld [vmem:[%s2 + $0x10] sm:$0xf]
    %v18 = vld [vmem:[%s2 + $0x18] sm:$0xf]
    %v19 = vld [vmem:[%s0] sm:$0xff]
    %v20 = vld [vmem:[%s0 + $0x8] sm:$0xf]
    %22 = vset.pattern.permute.xlu0 0
    %23 = vperm.xlu0 %22, %v19
    %v24 = vpop.permute.xlu0 %23
    %27 = vset.pattern.permute.xlu0 0
    %28 = vperm.xlu0 %27, %v20
    %v29 = vpop.permute.xlu0 %28
    %v31 = vmul.f32 %v15, %v24
    %v32 = vmul.f32 %v16, %v24
    %v33 = vmul.f32 %v17, %v29
    %v34 = vmul.f32 %v18, %v29
    %v35 = vld [vmem:[%s1] sm:$0xff]
    %v36 = vld [vmem:[%s1 + $0x8] sm:$0xf]
    %38 = vset.pattern.permute.xlu0 0
    %39 = vperm.xlu0 %38, %v35
    %v40 = vpop.permute.xlu0 %39
    %43 = vset.pattern.permute.xlu0 0
    %44 = vperm.xlu0 %43, %v36
    %v45 = vpop.permute.xlu0 %44
    %v47 = vadd.f32 %v31, %v40
    %v48 = vadd.f32 %v32, %v40
    %v49 = vadd.f32 %v33, %v45
    %v50 = vadd.f32 %v34, %v45
    %51 = vst [vmem:[#allocation2] sm:$0xff] %v47
    %52 = vst [vmem:[#allocation2 + $0x8] sm:$0xff] %v48
    %53 = vst [vmem:[#allocation2 + $0x10] sm:$0xf] %v49
    %54 = vst [vmem:[#allocation2 + $0x18] sm:$0xf] %v50
    // Predicated region
    $region14: #{tpu_custom_call.1} parent=1 // pred_check
      _
    $region15: #{tpu_custom_call.1} parent=1 // pred_check_branch
      %56 = sbr.rel (0) target = $region17
    $region16: #{tpu_custom_call.1} parent=1 // pred_region
      %s58 = ssub.s32 512, 512
      %59 = vsyncadd [#allocation3], %s58
      %s60 = sshll.u32 [#allocation2], 4
      %s61 = int_to_ptr.vmem [resolvable:$true] %s60
      %66 = dma.vmem_to_hbm [thread:$0]  %s61, 512, %s3, [#allocation3], 256, 256, 16
    $region17: #{tpu_custom_call.1} parent=1 // pred_fallthru
      _
    // Predicated region
    $region18: #{tpu_custom_call.1} parent=1 // pred_check
      _
    $region19: #{tpu_custom_call.1} parent=1 // pred_check_branch
      %68 = sbr.rel (0) target = $region21
    $region20: #{tpu_custom_call.1} parent=1 // pred_region
      %69 = dma.done [#allocation3], 512
    $region21: #{tpu_custom_call.1} parent=1 // pred_fallthru
      _
    %70 = vsyncpa [#allocation3], 1

</llo_original>
